<compile_context>
chip_gen: v7x
topology: tpu7x:2x2x1
jax: 0.10.0
libtpu: 0.0.40
codegen_flags: <defaults>
</compile_context>

<pallas_src>
import jax
import jax.numpy as jnp
from jax.experimental import pallas as pl
from jax.experimental.pallas import tpu as pltpu

MIDDLE_DIM = 8
LANES = 128
SUBLANE = 16  # bf16 sublane tile: batch-tile rows must be a multiple of 16


def _round_up(n, m):
    return ((n + m - 1) // m) * m


def _autoencoder_kernel(x_ref,
                        w1_ref, b1_ref,
                        w2_ref, b2_ref,
                        w3_ref, b3_ref,
                        w4_ref, b4_ref,
                        out_ref):
    """Four fused layers on one lane-packed batch tile.

    bf16 operands on the MXU (single-pass matmul), f32 accumulate / bias /
    tanh, bf16 store.
    """
    f32 = jnp.float32
    bf16 = jnp.bfloat16
    x = x_ref[...]  # bf16 (tb, lanes)
    h1 = jnp.tanh(jnp.dot(x, w1_ref[...], preferred_element_type=f32)
                  + b1_ref[...])
    z = jnp.tanh(jnp.dot(h1.astype(bf16), w2_ref[...], preferred_element_type=f32)
                 + b2_ref[...])
    h2 = jnp.tanh(jnp.dot(z.astype(bf16), w3_ref[...], preferred_element_type=f32)
                  + b3_ref[...])
    out = jnp.dot(h2.astype(bf16), w4_ref[...], preferred_element_type=f32) + b4_ref[...]
    out_ref[...] = out.astype(out_ref.dtype)


def preprocess_params(params, input_size, *, weight_dtype=jnp.bfloat16):
    """One-time glue, hoisted out of the per-call path.

    Transposes the PyTorch (out, in) weights to (in, out), builds the exact
    block-diagonal kron(I_pack, W^T) so `pack` independent samples share one
    lane row, tiles the biases to match, and casts weights to bf16 (biases
    stay f32 -- they are added to the f32 accumulator).
    """
    pack = LANES // input_size if (input_size <= LANES and
                                   LANES % input_size == 0) else 1
    eye = jnp.eye(pack, dtype=jnp.float32)

    def pw(w):  # (out, in) -> block-diagonal (in*pack, out*pack), bf16
        return jnp.kron(eye, w.T.astype(jnp.float32)).astype(weight_dtype)

    def pb(b):  # (out,) -> (1, out*pack), f32
        return jnp.tile(b.astype(jnp.float32), pack)[None, :]

    packed = (pw(params["enc_w1"]), pb(params["enc_b1"]),
              pw(params["enc_w2"]), pb(params["enc_b2"]),
              pw(params["dec_w1"]), pb(params["dec_b1"]),
              pw(params["dec_w2"]), pb(params["dec_b2"]))
    return pack, packed


def fc_autoencoder_forward(x, w1, b1, w2, b2, w3, b3, w4, b4,
                           *, pack, block_rows=4096):
    """Forward pass. `block_rows` = packed rows per grid step.

    With pack=8, 4096 packed rows == 32768 samples per tile (1 MiB bf16 per
    double-buffered in/out block + a few MiB of f32 intermediates).
    """
    B, input_size = x.shape
    lanes = pack * input_size

    if x.dtype != jnp.bfloat16:
        # Callers should hand us bf16 to avoid this extra HBM pass.
        x = x.astype(jnp.bfloat16)

    # Pad B up to a multiple of `pack` (tiny; no-op when pack | B), then
    # lane-pack: (B, F) -> (bp, pack*F), a contiguous row-major reshape.
    b_pad = _round_up(B, pack)
    if b_pad != B:
        x = jnp.pad(x, ((0, b_pad - B), (0, 0)))
    xp = x.reshape(b_pad // pack, lanes)
    bp = xp.shape[0]

    # Batch tile: multiple of the bf16 sublane tile, capped so the grid keeps
    # >= 2 parallel steps when possible (v7x megacore).  Ragged tails are
    # handled by Pallas partial-final-block masking -- no pad/slice copies.
    half = -(-bp // 2)
    tb = _round_up(min(block_rows, _round_up(half, SUBLANE)), SUBLANE)
    if tb >= bp:
        tb = bp  # tiny batch: single full-extent block (always a legal shape)
    grid = pl.cdiv(bp, tb)

    batch_spec = pl.BlockSpec((tb, lanes), lambda i: (i, 0))

    def resident(a):
        # Full-array block, constant index_map: DMA'd once, stays VMEM
        # resident; single buffer (no pointless double-buffering).
        return pl.BlockSpec(a.shape, lambda i: (0, 0),
                            pipeline_mode=pl.Buffered(1))

    out = pl.pallas_call(
        _autoencoder_kernel,
        out_shape=jax.ShapeDtypeStruct((bp, lanes), x.dtype),
        grid=(grid,),
        in_specs=[batch_spec,
                  resident(w1), resident(b1),
                  resident(w2), resident(b2),
                  resident(w3), resident(b3),
                  resident(w4), resident(b4)],
        out_specs=batch_spec,
        compiler_params=pltpu.CompilerParams(
            dimension_semantics=("parallel",),
            vmem_limit_bytes=32 * 1024 * 1024),
    )(xp, w1, b1, w2, b2, w3, b3, w4, b4)

    # Unpack; drop only the tiny pack-alignment pad rows (if any).
    out = out.reshape(b_pad, input_size)
    return out if b_pad == B else out[:B]


def _init_params(key, input_size, latent_size, middle_dim=MIDDLE_DIM):
    """Deterministic synthetic init, PyTorch nn.Linear convention (out, in)."""
    ks = jax.random.split(key, 8)

    def lin(kw, kb, fan_in, fan_out):
        bound = 1.0 / jnp.sqrt(fan_in)
        w = jax.random.uniform(kw, (fan_out, fan_in), jnp.float32, -bound, bound)
        b = jax.random.uniform(kb, (fan_out,), jnp.float32, -bound, bound)
        return w, b

    enc_w1, enc_b1 = lin(ks[0], ks[1], input_size, middle_dim)
    enc_w2, enc_b2 = lin(ks[2], ks[3], middle_dim, latent_size)
    dec_w1, dec_b1 = lin(ks[4], ks[5], latent_size, middle_dim)
    dec_w2, dec_b2 = lin(ks[6], ks[7], middle_dim, input_size)
    return dict(enc_w1=enc_w1, enc_b1=enc_b1, enc_w2=enc_w2, enc_b2=enc_b2,
                dec_w1=dec_w1, dec_b1=dec_b1, dec_w2=dec_w2, dec_b2=dec_b2)


def _reference_forward(x, p):
    h1 = jnp.tanh(x @ p["enc_w1"].T + p["enc_b1"])
    z = jnp.tanh(h1 @ p["enc_w2"].T + p["enc_b2"])
    h2 = jnp.tanh(z @ p["dec_w1"].T + p["dec_b1"])
    return h2 @ p["dec_w2"].T + p["dec_b2"]


if __name__ == "__main__":
    key = jax.random.PRNGKey(0)
    k_x, k_p = jax.random.split(key)

    batch, input_size, latent_size = 200, 16, 4
    x_f32 = jax.random.normal(k_x, (batch, input_size), jnp.float32)
    params = _init_params(k_p, input_size, latent_size)

    # One-time param packing / bf16 cast (hoisted glue).
    pack, packed = preprocess_params(params, input_size)

    # bf16 HBM-facing input (cast once, outside the per-forward path).
    x = x_f32.astype(jnp.bfloat16)

    fwd = jax.jit(fc_autoencoder_forward, static_argnames=("pack", "block_rows"))
    # Default block_rows=4096; at this tiny demo batch the >=2-grid-step cap
    # kicks in (25 packed rows -> two 16-row tiles, last one partial), which
    # exercises the multi-step grid plus the ragged-tail masking path.
    out = fwd(x, *packed, pack=pack, block_rows=4096)
    out = jax.block_until_ready(out)

    ref = _reference_forward(x_f32, params)
    assert out.shape == (batch, input_size)
    out_f32 = out.astype(jnp.float32)
    max_err = float(jnp.max(jnp.abs(out_f32 - ref)))
    # bf16 I/O + bf16 MXU operands (f32 accumulate): loosened tolerance.
    assert jnp.allclose(out_f32, ref, atol=5e-2, rtol=5e-2), f"max abs err {max_err}"

    print("KERNEL_OK")
</pallas_src>

<mosaic_0001>
module attributes {stable_mosaic.version = 11 : i64} {
  func.func @_autoencoder_kernel(%arg0: i32, %arg1: memref<16x128xbf16, #tpu.memory_space<vmem>>, %arg2: memref<128x64xbf16, #tpu.memory_space<vmem>>, %arg3: memref<1x64xf32, #tpu.memory_space<vmem>>, %arg4: memref<64x32xbf16, #tpu.memory_space<vmem>>, %arg5: memref<1x32xf32, #tpu.memory_space<vmem>>, %arg6: memref<32x64xbf16, #tpu.memory_space<vmem>>, %arg7: memref<1x64xf32, #tpu.memory_space<vmem>>, %arg8: memref<64x128xbf16, #tpu.memory_space<vmem>>, %arg9: memref<1x128xf32, #tpu.memory_space<vmem>>, %arg10: memref<16x128xbf16, #tpu.memory_space<vmem>>) attributes {dimension_semantics = [#tpu.dimension_semantics<parallel>], iteration_bounds = array<i64: 2>, scalar_prefetch = 0 : i64, scratch_operands = 0 : i64, tpu.core_type = #tpu.core_type<tc>, window_params = [{transform_indices = @transform_0, window_bounds = array<i64: 16, 128>}, {pipeline_mode = #tpu.pipeline_mode<synchronous>, transform_indices = @transform_1, window_bounds = array<i64: 128, 64>}, {pipeline_mode = #tpu.pipeline_mode<synchronous>, transform_indices = @transform_2, window_bounds = array<i64: 1, 64>}, {pipeline_mode = #tpu.pipeline_mode<synchronous>, transform_indices = @transform_3, window_bounds = array<i64: 64, 32>}, {pipeline_mode = #tpu.pipeline_mode<synchronous>, transform_indices = @transform_4, window_bounds = array<i64: 1, 32>}, {pipeline_mode = #tpu.pipeline_mode<synchronous>, transform_indices = @transform_5, window_bounds = array<i64: 32, 64>}, {pipeline_mode = #tpu.pipeline_mode<synchronous>, transform_indices = @transform_6, window_bounds = array<i64: 1, 64>}, {pipeline_mode = #tpu.pipeline_mode<synchronous>, transform_indices = @transform_7, window_bounds = array<i64: 64, 128>}, {pipeline_mode = #tpu.pipeline_mode<synchronous>, transform_indices = @transform_8, window_bounds = array<i64: 1, 128>}, {transform_indices = @transform_9, window_bounds = array<i64: 16, 128>}]} {
    %c0 = arith.constant 0 : index
    %c0_0 = arith.constant 0 : index
    %0 = vector.load %arg1[%c0, %c0_0] : memref<16x128xbf16, #tpu.memory_space<vmem>>, vector<16x128xbf16>
    %c0_1 = arith.constant 0 : index
    %c0_2 = arith.constant 0 : index
    %1 = vector.load %arg2[%c0_1, %c0_2] : memref<128x64xbf16, #tpu.memory_space<vmem>>, vector<128x64xbf16>
    %cst = arith.constant dense<0.000000e+00> : vector<16x64xf32>
    %2 = tpu.matmul %0, %1, %cst {dimension_numbers = #tpu.dot_dimension_numbers<[1], [0], [0], [1], [0, 0, 1, 1], [], []>} : vector<16x128xbf16>, vector<128x64xbf16>, vector<16x64xf32> -> vector<16x64xf32>
    %c0_3 = arith.constant 0 : index
    %c0_4 = arith.constant 0 : index
    %3 = vector.load %arg3[%c0_3, %c0_4] : memref<1x64xf32, #tpu.memory_space<vmem>>, vector<1x64xf32>
    %4 = vector.broadcast %3 : vector<1x64xf32> to vector<16x64xf32>
    %5 = arith.addf %2, %4 : vector<16x64xf32>
    %6 = math.tanh %5 : vector<16x64xf32>
    %7 = arith.truncf %6 : vector<16x64xf32> to vector<16x64xbf16>
    %c0_5 = arith.constant 0 : index
    %c0_6 = arith.constant 0 : index
    %8 = vector.load %arg4[%c0_5, %c0_6] : memref<64x32xbf16, #tpu.memory_space<vmem>>, vector<64x32xbf16>
    %cst_7 = arith.constant dense<0.000000e+00> : vector<16x32xf32>
    %9 = tpu.matmul %7, %8, %cst_7 {dimension_numbers = #tpu.dot_dimension_numbers<[1], [0], [0], [1], [0, 0, 1, 1], [], []>} : vector<16x64xbf16>, vector<64x32xbf16>, vector<16x32xf32> -> vector<16x32xf32>
    %c0_8 = arith.constant 0 : index
    %c0_9 = arith.constant 0 : index
    %10 = vector.load %arg5[%c0_8, %c0_9] : memref<1x32xf32, #tpu.memory_space<vmem>>, vector<1x32xf32>
    %11 = vector.broadcast %10 : vector<1x32xf32> to vector<16x32xf32>
    %12 = arith.addf %9, %11 : vector<16x32xf32>
    %13 = math.tanh %12 : vector<16x32xf32>
    %14 = arith.truncf %13 : vector<16x32xf32> to vector<16x32xbf16>
    %c0_10 = arith.constant 0 : index
    %c0_11 = arith.constant 0 : index
    %15 = vector.load %arg6[%c0_10, %c0_11] : memref<32x64xbf16, #tpu.memory_space<vmem>>, vector<32x64xbf16>
    %cst_12 = arith.constant dense<0.000000e+00> : vector<16x64xf32>
    %16 = tpu.matmul %14, %15, %cst_12 {dimension_numbers = #tpu.dot_dimension_numbers<[1], [0], [0], [1], [0, 0, 1, 1], [], []>} : vector<16x32xbf16>, vector<32x64xbf16>, vector<16x64xf32> -> vector<16x64xf32>
    %c0_13 = arith.constant 0 : index
    %c0_14 = arith.constant 0 : index
    %17 = vector.load %arg7[%c0_13, %c0_14] : memref<1x64xf32, #tpu.memory_space<vmem>>, vector<1x64xf32>
    %18 = vector.broadcast %17 : vector<1x64xf32> to vector<16x64xf32>
    %19 = arith.addf %16, %18 : vector<16x64xf32>
    %20 = math.tanh %19 : vector<16x64xf32>
    %21 = arith.truncf %20 : vector<16x64xf32> to vector<16x64xbf16>
    %c0_15 = arith.constant 0 : index
    %c0_16 = arith.constant 0 : index
    %22 = vector.load %arg8[%c0_15, %c0_16] : memref<64x128xbf16, #tpu.memory_space<vmem>>, vector<64x128xbf16>
    %cst_17 = arith.constant dense<0.000000e+00> : vector<16x128xf32>
    %23 = tpu.matmul %21, %22, %cst_17 {dimension_numbers = #tpu.dot_dimension_numbers<[1], [0], [0], [1], [0, 0, 1, 1], [], []>} : vector<16x64xbf16>, vector<64x128xbf16>, vector<16x128xf32> -> vector<16x128xf32>
    %c0_18 = arith.constant 0 : index
    %c0_19 = arith.constant 0 : index
    %24 = vector.load %arg9[%c0_18, %c0_19] : memref<1x128xf32, #tpu.memory_space<vmem>>, vector<1x128xf32>
    %25 = vector.broadcast %24 : vector<1x128xf32> to vector<16x128xf32>
    %26 = arith.addf %23, %25 : vector<16x128xf32>
    %27 = arith.truncf %26 : vector<16x128xf32> to vector<16x128xbf16>
    %c0_20 = arith.constant 0 : index
    %c0_21 = arith.constant 0 : index
    %28 = vector.load %arg10[%c0_20, %c0_21] : memref<16x128xbf16, #tpu.memory_space<vmem>>, vector<16x128xbf16>
    tpu.vector_store %arg10[%c0_20, %c0_21], %27 {strides = array<i32>} : memref<16x128xbf16, #tpu.memory_space<vmem>>, vector<16x128xbf16>,
    return
  }
  func.func @transform_0(%arg0: i32) -> (i32, i32) {
    %c0_i32 = arith.constant 0 : i32
    %c0_i32_0 = arith.constant 0 : i32
    return %arg0, %c0_i32 : i32, i32
  }
  func.func @transform_1(%arg0: i32) -> (i32, i32) {
    %c0_i32 = arith.constant 0 : i32
    %c0_i32_0 = arith.constant 0 : i32
    %c0_i32_1 = arith.constant 0 : i32
    return %c0_i32, %c0_i32_0 : i32, i32
  }
  func.func @transform_2(%arg0: i32) -> (i32, i32) {
    %c0_i32 = arith.constant 0 : i32
    %c0_i32_0 = arith.constant 0 : i32
    %c0_i32_1 = arith.constant 0 : i32
    return %c0_i32, %c0_i32_0 : i32, i32
  }
  func.func @transform_3(%arg0: i32) -> (i32, i32) {
    %c0_i32 = arith.constant 0 : i32
    %c0_i32_0 = arith.constant 0 : i32
    %c0_i32_1 = arith.constant 0 : i32
    return %c0_i32, %c0_i32_0 : i32, i32
  }
  func.func @transform_4(%arg0: i32) -> (i32, i32) {
    %c0_i32 = arith.constant 0 : i32
    %c0_i32_0 = arith.constant 0 : i32
    %c0_i32_1 = arith.constant 0 : i32
    return %c0_i32, %c0_i32_0 : i32, i32
  }
  func.func @transform_5(%arg0: i32) -> (i32, i32) {
    %c0_i32 = arith.constant 0 : i32
    %c0_i32_0 = arith.constant 0 : i32
    %c0_i32_1 = arith.constant 0 : i32
    return %c0_i32, %c0_i32_0 : i32, i32
  }
  func.func @transform_6(%arg0: i32) -> (i32, i32) {
    %c0_i32 = arith.constant 0 : i32
    %c0_i32_0 = arith.constant 0 : i32
    %c0_i32_1 = arith.constant 0 : i32
    return %c0_i32, %c0_i32_0 : i32, i32
  }
  func.func @transform_7(%arg0: i32) -> (i32, i32) {
    %c0_i32 = arith.constant 0 : i32
    %c0_i32_0 = arith.constant 0 : i32
    %c0_i32_1 = arith.constant 0 : i32
    return %c0_i32, %c0_i32_0 : i32, i32
  }
  func.func @transform_8(%arg0: i32) -> (i32, i32) {
    %c0_i32 = arith.constant 0 : i32
    %c0_i32_0 = arith.constant 0 : i32
    %c0_i32_1 = arith.constant 0 : i32
    return %c0_i32, %c0_i32_0 : i32, i32
  }
  func.func @transform_9(%arg0: i32) -> (i32, i32) {
    %c0_i32 = arith.constant 0 : i32
    %c0_i32_0 = arith.constant 0 : i32
    return %arg0, %c0_i32 : i32, i32
  }
}

</mosaic_0001>

<llo_original>
// kernel: fc_autoencoder_forward.1
$region0: #{fc_autoencoder_forward.1}
  #allocation0 [shape = 'u32[]', space=smem, size = 0x4, offset = 0x4, fixed_abs, tag = 'smem constant byte address 0x4 - core index']
  #allocation1 [shape = 'u32[144,128]{1,0:T(1,128)}', space=vmem, size = 0x12000, scoped, tag = 'internal scratch']
  %s0 = inlined_call_operand.vmem [shape: bf16[25,128], index: 0, kind: input, shape index: {}]
  %s1 = inlined_call_operand.vmem [shape: bf16[128,64], index: 1, kind: input, shape index: {}]
  %s2 = inlined_call_operand.vmem [shape: f32[1,64], index: 2, kind: input, shape index: {}]
  %s3 = inlined_call_operand.vmem [shape: bf16[64,32], index: 3, kind: input, shape index: {}]
  %s4 = inlined_call_operand.vmem [shape: f32[1,32], index: 4, kind: input, shape index: {}]
  %s5 = inlined_call_operand.vmem [shape: bf16[32,64], index: 5, kind: input, shape index: {}]
  %s6 = inlined_call_operand.vmem [shape: f32[1,64], index: 6, kind: input, shape index: {}]
  %s7 = inlined_call_operand.vmem [shape: bf16[64,128], index: 7, kind: input, shape index: {}]
  %s8 = inlined_call_operand.vmem [shape: f32[1,128], index: 8, kind: input, shape index: {}]
  %s9 = inlined_call_operand.vmem [shape: bf16[25,128], index: 9, kind: output, shape index: {}]
  %s10 = sld [smem:[#allocation0]]
  $region69: #{fc_autoencoder_forward.1} parent=0
    _
  %s12 = ssub.s32 1, %s10
  %s13 = scalar_select 0, %s12, %s10
  loop: start=0, step=1, limit=4
  $region2: #{fc_autoencoder_forward.1} parent=0 // loop_pre_header
    _
  $region3: #{fc_autoencoder_forward.1} parent=0 // loop_header
    %s15 = sphi 0, %s19
    %p16 = scmp.ge.s32.totalorder %s15, 4
    %s25 = sphi 0, %s27
    %s28 = sphi 0, %s25
    %s29 = sphi 0, %s28
    %s45 = sphi 0, %s29
    %s49 = sphi 0, %s49
    %s51 = sphi 0, %s49
    %s52 = sphi 0, %s51
    %s66 = sphi 0, %s52
    %s70 = sphi 0, %s70
    %s72 = sphi 0, %s70
    %s73 = sphi 0, %s72
    %s87 = sphi 0, %s73
    %s91 = sphi 0, %s91
    %s93 = sphi 0, %s91
    %s94 = sphi 0, %s93
    %s108 = sphi 0, %s94
    %s112 = sphi 0, %s112
    %s114 = sphi 0, %s112
    %s115 = sphi 0, %s114
    %s129 = sphi 0, %s115
    %s133 = sphi 0, %s133
    %s135 = sphi 0, %s133
    %s136 = sphi 0, %s135
    %s150 = sphi 0, %s136
    %s154 = sphi 0, %s154
    %s156 = sphi 0, %s154
    %s157 = sphi 0, %s156
    %s171 = sphi 0, %s157
    %s175 = sphi 0, %s175
    %s177 = sphi 0, %s175
    %s178 = sphi 0, %s177
    %s192 = sphi 0, %s178
    %s196 = sphi 0, %s196
    %s198 = sphi 0, %s196
    %s199 = sphi 0, %s198
    %s213 = sphi 0, %s199
    %s219 = sphi 0, %s221
    %s222 = sphi 0, %s219
    %s223 = sphi 0, %s222
    %s239 = sphi 0, %s223
  $region4: #{fc_autoencoder_forward.1} parent=0 // loop_header_branch
    %18 = sbr.rel (%p16) target = $region8
  $region5: #{fc_autoencoder_forward.1} parent=0 // loop_body
    %s20 = ssub.s32 %s15, 1
    %s21 = ssub.s32 %s15, 2
    %s22 = sadd.s32 %s15, 1
    %s23 = ssub.s32 %s15, %s22
    %p24 = scmp.eq.s32.totalorder %s23, 0
    %s26 = sadd.s32 %s25, 1
    %s27 = scalar_select %p24, %s25, %s26
    %p30 = pneg %p24
    %p31 = scmp.eq.s32.totalorder %s15, 1
    %p32 = por %p30, %p31
    %p33 = scmp.ne.s32.totalorder %s25, %s28
    %p34 = scmp.eq.s32.totalorder %s15, 0
    %p35 = por %p33, %p34
    %p36 = scmp.ne.s32.totalorder %s25, %s28
    %p37 = scmp.eq.s32.totalorder %s20, 1
    %p38 = por %p36, %p37
    %p39 = scmp.ne.s32.totalorder %s28, %s29
    %p40 = scmp.eq.s32.totalorder %s20, 0
    %p41 = por %p39, %p40
    %p42 = scmp.ne.s32.totalorder %s28, %s29
    %p43 = scmp.eq.s32.totalorder %s21, 1
    %p44 = por %p42, %p43
    %p46 = scmp.ne.s32.totalorder %s29, %s45
    %p47 = scmp.eq.s32.totalorder %s21, 0
    %p48 = por %p46, %p47
    %s50 = sadd.s32 %s49, 1
    %p53 = scmp.eq.s32.totalorder %s15, 1
    %p54 = scmp.ne.s32.totalorder %s49, %s51
    %p55 = scmp.eq.s32.totalorder %s15, 0
    %p56 = por %p54, %p55
    %p57 = scmp.ne.s32.totalorder %s49, %s51
    %p58 = scmp.eq.s32.totalorder %s20, 1
    %p59 = por %p57, %p58
    %p60 = scmp.ne.s32.totalorder %s51, %s52
    %p61 = scmp.eq.s32.totalorder %s20, 0
    %p62 = por %p60, %p61
    %p63 = scmp.ne.s32.totalorder %s51, %s52
    %p64 = scmp.eq.s32.totalorder %s21, 1
    %p65 = por %p63, %p64
    %p67 = scmp.ne.s32.totalorder %s52, %s66
    %p68 = scmp.eq.s32.totalorder %s21, 0
    %p69 = por %p67, %p68
    %s71 = sadd.s32 %s70, 1
    %p74 = scmp.eq.s32.totalorder %s15, 1
    %p75 = scmp.ne.s32.totalorder %s70, %s72
    %p76 = scmp.eq.s32.totalorder %s15, 0
    %p77 = por %p75, %p76
    %p78 = scmp.ne.s32.totalorder %s70, %s72
    %p79 = scmp.eq.s32.totalorder %s20, 1
    %p80 = por %p78, %p79
    %p81 = scmp.ne.s32.totalorder %s72, %s73
    %p82 = scmp.eq.s32.totalorder %s20, 0
    %p83 = por %p81, %p82
    %p84 = scmp.ne.s32.totalorder %s72, %s73
    %p85 = scmp.eq.s32.totalorder %s21, 1
    %p86 = por %p84, %p85
    %p88 = scmp.ne.s32.totalorder %s73, %s87
    %p89 = scmp.eq.s32.totalorder %s21, 0
    %p90 = por %p88, %p89
    %s92 = sadd.s32 %s91, 1
    %p95 = scmp.eq.s32.totalorder %s15, 1
    %p96 = scmp.ne.s32.totalorder %s91, %s93
    %p97 = scmp.eq.s32.totalorder %s15, 0
    %p98 = por %p96, %p97
    %p99 = scmp.ne.s32.totalorder %s91, %s93
    %p100 = scmp.eq.s32.totalorder %s20, 1
    %p101 = por %p99, %p100
    %p102 = scmp.ne.s32.totalorder %s93, %s94
    %p103 = scmp.eq.s32.totalorder %s20, 0
    %p104 = por %p102, %p103
    %p105 = scmp.ne.s32.totalorder %s93, %s94
    %p106 = scmp.eq.s32.totalorder %s21, 1
    %p107 = por %p105, %p106
    %p109 = scmp.ne.s32.totalorder %s94, %s108
    %p110 = scmp.eq.s32.totalorder %s21, 0
    %p111 = por %p109, %p110
    %s113 = sadd.s32 %s112, 1
    %p116 = scmp.eq.s32.totalorder %s15, 1
    %p117 = scmp.ne.s32.totalorder %s112, %s114
    %p118 = scmp.eq.s32.totalorder %s15, 0
    %p119 = por %p117, %p118
    %p120 = scmp.ne.s32.totalorder %s112, %s114
    %p121 = scmp.eq.s32.totalorder %s20, 1
    %p122 = por %p120, %p121
    %p123 = scmp.ne.s32.totalorder %s114, %s115
    %p124 = scmp.eq.s32.totalorder %s20, 0
    %p125 = por %p123, %p124
    %p126 = scmp.ne.s32.totalorder %s114, %s115
    %p127 = scmp.eq.s32.totalorder %s21, 1
    %p128 = por %p126, %p127
    %p130 = scmp.ne.s32.totalorder %s115, %s129
    %p131 = scmp.eq.s32.totalorder %s21, 0
    %p132 = por %p130, %p131
    %s134 = sadd.s32 %s133, 1
    %p137 = scmp.eq.s32.totalorder %s15, 1
    %p138 = scmp.ne.s32.totalorder %s133, %s135
    %p139 = scmp.eq.s32.totalorder %s15, 0
    %p140 = por %p138, %p139
    %p141 = scmp.ne.s32.totalorder %s133, %s135
    %p142 = scmp.eq.s32.totalorder %s20, 1
    %p143 = por %p141, %p142
    %p144 = scmp.ne.s32.totalorder %s135, %s136
    %p145 = scmp.eq.s32.totalorder %s20, 0
    %p146 = por %p144, %p145
    %p147 = scmp.ne.s32.totalorder %s135, %s136
    %p148 = scmp.eq.s32.totalorder %s21, 1
    %p149 = por %p147, %p148
    %p151 = scmp.ne.s32.totalorder %s136, %s150
    %p152 = scmp.eq.s32.totalorder %s21, 0
    %p153 = por %p151, %p152
    %s155 = sadd.s32 %s154, 1
    %p158 = scmp.eq.s32.totalorder %s15, 1
    %p159 = scmp.ne.s32.totalorder %s154, %s156
    %p160 = scmp.eq.s32.totalorder %s15, 0
    %p161 = por %p159, %p160
    %p162 = scmp.ne.s32.totalorder %s154, %s156
    %p163 = scmp.eq.s32.totalorder %s20, 1
    %p164 = por %p162, %p163
    %p165 = scmp.ne.s32.totalorder %s156, %s157
    %p166 = scmp.eq.s32.totalorder %s20, 0
    %p167 = por %p165, %p166
    %p168 = scmp.ne.s32.totalorder %s156, %s157
    %p169 = scmp.eq.s32.totalorder %s21, 1
    %p170 = por %p168, %p169
    %p172 = scmp.ne.s32.totalorder %s157, %s171
    %p173 = scmp.eq.s32.totalorder %s21, 0
    %p174 = por %p172, %p173
    %s176 = sadd.s32 %s175, 1
    %p179 = scmp.eq.s32.totalorder %s15, 1
    %p180 = scmp.ne.s32.totalorder %s175, %s177
    %p181 = scmp.eq.s32.totalorder %s15, 0
    %p182 = por %p180, %p181
    %p183 = scmp.ne.s32.totalorder %s175, %s177
    %p184 = scmp.eq.s32.totalorder %s20, 1
    %p185 = por %p183, %p184
    %p186 = scmp.ne.s32.totalorder %s177, %s178
    %p187 = scmp.eq.s32.totalorder %s20, 0
    %p188 = por %p186, %p187
    %p189 = scmp.ne.s32.totalorder %s177, %s178
    %p190 = scmp.eq.s32.totalorder %s21, 1
    %p191 = por %p189, %p190
    %p193 = scmp.ne.s32.totalorder %s178, %s192
    %p194 = scmp.eq.s32.totalorder %s21, 0
    %p195 = por %p193, %p194
    %s197 = sadd.s32 %s196, 1
    %p200 = scmp.eq.s32.totalorder %s15, 1
    %p201 = scmp.ne.s32.totalorder %s196, %s198
    %p202 = scmp.eq.s32.totalorder %s15, 0
    %p203 = por %p201, %p202
    %p204 = scmp.ne.s32.totalorder %s196, %s198
    %p205 = scmp.eq.s32.totalorder %s20, 1
    %p206 = por %p204, %p205
    %p207 = scmp.ne.s32.totalorder %s198, %s199
    %p208 = scmp.eq.s32.totalorder %s20, 0
    %p209 = por %p207, %p208
    %p210 = scmp.ne.s32.totalorder %s198, %s199
    %p211 = scmp.eq.s32.totalorder %s21, 1
    %p212 = por %p210, %p211
    %p214 = scmp.ne.s32.totalorder %s199, %s213
    %p215 = scmp.eq.s32.totalorder %s21, 0
    %p216 = por %p214, %p215
    %s217 = ssub.s32 %s15, %s22
    %p218 = scmp.eq.s32.totalorder %s217, 0
    %s220 = sadd.s32 %s219, 1
    %s221 = scalar_select %p218, %s219, %s220
    %p224 = pneg %p218
    %p225 = scmp.eq.s32.totalorder %s15, 1
    %p226 = por %p224, %p225
    %p227 = scmp.ne.s32.totalorder %s219, %s222
    %p228 = scmp.eq.s32.totalorder %s15, 0
    %p229 = por %p227, %p228
    %p230 = scmp.ne.s32.totalorder %s219, %s222
    %p231 = scmp.eq.s32.totalorder %s20, 1
    %p232 = por %p230, %p231
    %p233 = scmp.ne.s32.totalorder %s222, %s223
    %p234 = scmp.eq.s32.totalorder %s20, 0
    %p235 = por %p233, %p234
    %p236 = scmp.ne.s32.totalorder %s222, %s223
    %p237 = scmp.eq.s32.totalorder %s21, 1
    %p238 = por %p236, %p237
    %p240 = scmp.ne.s32.totalorder %s223, %s239
    %p241 = scmp.eq.s32.totalorder %s21, 0
    %p242 = por %p240, %p241
    %p243 = scmp.le.s32.totalorder 1, %s15
    %p244 = scmp.lt.s32.totalorder %s15, 3
    %p245 = pnand %p243, %p244
    %p246 = pneg %p245
    // Predicated region
    $region9: #{fc_autoencoder_forward.1} parent=5 // pred_check
      _
    $region10: #{fc_autoencoder_forward.1} parent=5 // pred_check_branch
      %248 = sbr.rel (%p245) target = $region12
    $region11: #{fc_autoencoder_forward.1} parent=5 // pred_region
      %s249 = ssub.s32 %s15, 1
      // Predicated region
      $region13: #{fc_autoencoder_forward.1} parent=11 // pred_check
        %p250 = pneg %p62
      $region14: #{fc_autoencoder_forward.1} parent=11 // pred_check_branch
        %252 = sbr.rel (%p250) target = $region16
      $region15: #{fc_autoencoder_forward.1} parent=11 // pred_region
        _
      $region16: #{fc_autoencoder_forward.1} parent=11 // pred_fallthru
        _
      // Predicated region
      $region17: #{fc_autoencoder_forward.1} parent=11 // pred_check
        %p253 = pneg %p83
      $region18: #{fc_autoencoder_forward.1} parent=11 // pred_check_branch
        %255 = sbr.rel (%p253) target = $region20
      $region19: #{fc_autoencoder_forward.1} parent=11 // pred_region
        _
      $region20: #{fc_autoencoder_forward.1} parent=11 // pred_fallthru
        _
      // Predicated region
      $region21: #{fc_autoencoder_forward.1} parent=11 // pred_check
        %p256 = pneg %p104
      $region22: #{fc_autoencoder_forward.1} parent=11 // pred_check_branch
        %258 = sbr.rel (%p256) target = $region24
      $region23: #{fc_autoencoder_forward.1} parent=11 // pred_region
        _
      $region24: #{fc_autoencoder_forward.1} parent=11 // pred_fallthru
        _
      // Predicated region
      $region25: #{fc_autoencoder_forward.1} parent=11 // pred_check
        %p259 = pneg %p125
      $region26: #{fc_autoencoder_forward.1} parent=11 // pred_check_branch
        %261 = sbr.rel (%p259) target = $region28
      $region27: #{fc_autoencoder_forward.1} parent=11 // pred_region
        _
      $region28: #{fc_autoencoder_forward.1} parent=11 // pred_fallthru
        _
      // Predicated region
      $region29: #{fc_autoencoder_forward.1} parent=11 // pred_check
        %p262 = pneg %p146
      $region30: #{fc_autoencoder_forward.1} parent=11 // pred_check_branch
        %264 = sbr.rel (%p262) target = $region32
      $region31: #{fc_autoencoder_forward.1} parent=11 // pred_region
        _
      $region32: #{fc_autoencoder_forward.1} parent=11 // pred_fallthru
        _
      // Predicated region
      $region33: #{fc_autoencoder_forward.1} parent=11 // pred_check
        %p265 = pneg %p167
      $region34: #{fc_autoencoder_forward.1} parent=11 // pred_check_branch
        %267 = sbr.rel (%p265) target = $region36
      $region35: #{fc_autoencoder_forward.1} parent=11 // pred_region
        _
      $region36: #{fc_autoencoder_forward.1} parent=11 // pred_fallthru
        _
      // Predicated region
      $region37: #{fc_autoencoder_forward.1} parent=11 // pred_check
        %p268 = pneg %p188
      $region38: #{fc_autoencoder_forward.1} parent=11 // pred_check_branch
        %270 = sbr.rel (%p268) target = $region40
      $region39: #{fc_autoencoder_forward.1} parent=11 // pred_region
        _
      $region40: #{fc_autoencoder_forward.1} parent=11 // pred_fallthru
        _
      // Predicated region
      $region41: #{fc_autoencoder_forward.1} parent=11 // pred_check
        %p271 = pneg %p209
      $region42: #{fc_autoencoder_forward.1} parent=11 // pred_check_branch
        %273 = sbr.rel (%p271) target = $region44
      $region43: #{fc_autoencoder_forward.1} parent=11 // pred_region
        _
      $region44: #{fc_autoencoder_forward.1} parent=11 // pred_fallthru
        _
    $region12: #{fc_autoencoder_forward.1} parent=5 // pred_fallthru
      _
    %p274 = scmp.lt.s32.totalorder %s15, 2
    // Predicated region
    $region45: #{fc_autoencoder_forward.1} parent=5 // pred_check
      %p275 = pneg %p274
    $region46: #{fc_autoencoder_forward.1} parent=5 // pred_check_branch
      %277 = sbr.rel (%p275) target = $region48
    $region47: #{fc_autoencoder_forward.1} parent=5 // pred_region
      // Predicated region
      $region49: #{fc_autoencoder_forward.1} parent=47 // pred_check
        %p278 = pneg %p35
      $region50: #{fc_autoencoder_forward.1} parent=47 // pred_check_branch
        %280 = sbr.rel (%p278) target = $region52
      $region51: #{fc_autoencoder_forward.1} parent=47 // pred_region
        %s281 = smul.u32 2, %s15
        %p282 = scmp.lt.s32.totalorder %s281, 3
        %s283 = scalar_select %p282, %s281, 3
        %s284 = smul.addr %s283, 4
        %s285 = scalar_lea.vmem %s0, %s284
        %s286 = smul.u32 2, %s15
      $region52: #{fc_autoencoder_forward.1} parent=47 // pred_fallthru
        _
    $region48: #{fc_autoencoder_forward.1} parent=5 // pred_fallthru
      _
    %p287 = scmp.le.s32.totalorder 1, %s15
    %p288 = scmp.lt.s32.totalorder %s15, 3
    %p289 = pnand %p287, %p288
    %p290 = pneg %p289
    // Predicated region
    $region53: #{fc_autoencoder_forward.1} parent=5 // pred_check
      _
    $region54: #{fc_autoencoder_forward.1} parent=5 // pred_check_branch
      %292 = sbr.rel (%p289) target = $region56
    $region55: #{fc_autoencoder_forward.1} parent=5 // pred_region
      %s293 = ssub.s32 %s15, 1
      %s294 = smul.u32 2, %s20
      %p295 = scmp.lt.s32.totalorder %s294, 3
      %s296 = scalar_select %p295, %s294, 3
      %s297 = smul.addr %s296, 4
      %s298 = scalar_lea.vmem %s0, %s297
      %p299 = pneg %p41
      %p300 = pneg %p38
      %p301 = pneg %p62
      %p302 = pneg %p59
      %p303 = pneg %p83
      %p304 = pneg %p80
      %p305 = pneg %p104
      %p306 = pneg %p101
      %p307 = pneg %p125
      %p308 = pneg %p122
      %p309 = pneg %p146
      %p310 = pneg %p143
      %p311 = pneg %p167
      %p312 = pneg %p164
      %p313 = pneg %p188
      %p314 = pneg %p185
      %p315 = pneg %p209
      %p316 = pneg %p206
      %p317 = pneg %p235
      %p318 = pneg %p232
      %s319 = smul.u32 2, %s20
      %p320 = scmp.lt.s32.totalorder %s319, 3
      %s321 = scalar_select %p320, %s319, 3
      %s322 = smul.addr %s321, 4
      %s323 = scalar_lea.vmem %s9, %s322
      %s324 = smul.u32 2, %s20
      %p325 = scmp.lt.s32.totalorder %s324, 3
      %s326 = scalar_select %p325, %s324, 3
      %s327 = smul.addr %s326, 4
      %s328 = scalar_lea.vmem %s0, %s327
      %s329 = smul.u32 2, %s20
      %s330 = smul.u32 2, %s20
      %p331 = scmp.lt.s32.totalorder %s330, 3
      %s332 = scalar_select %p331, %s330, 3
      %s333 = smul.addr %s332, 4
      %s334 = scalar_lea.vmem %s9, %s333
      %s335 = smul.u32 2, %s20
      %v337 = vld [vmem:[%s328] sm:$0xf]
      %v338 = vld [vmem:[%s328 + $0x4] sm:$0xf]
      %v339 = vld [vmem:[%s1] sm:$0xf]
      %v340 = vld [vmem:[%s1 + $0x4] sm:$0xf]
      %v341 = vld [vmem:[%s1 + $0x8] sm:$0xf]
      %v342 = vld [vmem:[%s1 + $0xc] sm:$0xf]
      %v343 = vld [vmem:[%s1 + $0x10] sm:$0xf]
      %v344 = vld [vmem:[%s1 + $0x14] sm:$0xf]
      %v345 = vld [vmem:[%s1 + $0x18] sm:$0xf]
      %v346 = vld [vmem:[%s1 + $0x1c] sm:$0xf]
      %v347 = vld [vmem:[%s1 + $0x20] sm:$0xf]
      %v348 = vld [vmem:[%s1 + $0x24] sm:$0xf]
      %v349 = vld [vmem:[%s1 + $0x28] sm:$0xf]
      %v350 = vld [vmem:[%s1 + $0x2c] sm:$0xf]
      %v351 = vld [vmem:[%s1 + $0x30] sm:$0xf]
      %v352 = vld [vmem:[%s1 + $0x34] sm:$0xf]
      %v353 = vld [vmem:[%s1 + $0x38] sm:$0xf]
      %v354 = vld [vmem:[%s1 + $0x3c] sm:$0xf]
      %v355 = vld [vmem:[%s2] sm:$0x1]
      %v357 = vlaneseq
      %v358 = vshrl.u32 %v357, 7
      %v359 = vsub.s32 0, %v358
      %v360 = vrot.slane %v355, %v359
      %v364 = vunpack.c.l.b16 %v337
      %v365 = vunpack.c.l.b16 %v338
      %v366 = vpack.c.b16 %v365, %v364
      %v384 = vunpack.c.l.b16 %v339
      %v385 = vunpack.c.l.b16 %v340
      %v386 = vunpack.c.l.b16 %v341
      %v387 = vunpack.c.l.b16 %v342
      %v388 = vunpack.c.l.b16 %v343
      %v389 = vunpack.c.l.b16 %v344
      %v390 = vunpack.c.l.b16 %v345
      %v391 = vunpack.c.l.b16 %v346
      %v392 = vunpack.c.l.b16 %v347
      %v393 = vunpack.c.l.b16 %v348
      %v394 = vunpack.c.l.b16 %v349
      %v395 = vunpack.c.l.b16 %v350
      %v396 = vunpack.c.l.b16 %v351
      %v397 = vunpack.c.l.b16 %v352
      %v398 = vunpack.c.l.b16 %v353
      %v399 = vunpack.c.l.b16 %v354
      %v400 = vpack.c.b16 %v385, %v384
      %v401 = vpack.c.b16 %v387, %v386
      %v402 = vpack.c.b16 %v389, %v388
      %v403 = vpack.c.b16 %v391, %v390
      %v404 = vpack.c.b16 %v393, %v392
      %v405 = vpack.c.b16 %v395, %v394
      %v406 = vpack.c.b16 %v397, %v396
      %v407 = vpack.c.b16 %v399, %v398
      %416 = vmatprep.subr.bf16.mxu0 0
      %417 = vmatpush1.bf16.msra.mxu0 %v400
      %418 = vmatprep.subr.bf16.mxu0 0
      %419 = vmatpush1.bf16.msra.mxu0 %v401
      %420 = vmatprep.subr.bf16.mxu0 0
      %421 = vmatpush1.bf16.msra.mxu0 %v402
      %422 = vmatprep.subr.bf16.mxu0 0
      %423 = vmatpush1.bf16.msra.mxu0 %v403
      %424 = vmatprep.subr.bf16.mxu0 0
      %425 = vmatpush1.bf16.msra.mxu0 %v404
      %426 = vmatprep.subr.bf16.mxu0 0
      %427 = vmatpush1.bf16.msra.mxu0 %v405
      %428 = vmatprep.subr.bf16.mxu0 0
      %429 = vmatpush1.bf16.msra.mxu0 %v406
      %430 = vmatprep.subr.bf16.mxu0 0
      %431 = vmatpush1.bf16.msra.mxu0 %v407
      %432 = vmatprep.subr.bf16.mxu0 0
      %433 = vmatpush1.bf16.msra.mxu0 0
      %434 = vmatprep.subr.bf16.mxu0 0
      %435 = vmatpush1.bf16.msra.mxu0 0
      %436 = vmatprep.subr.bf16.mxu0 0
      %437 = vmatpush1.bf16.msra.mxu0 0
      %438 = vmatprep.subr.bf16.mxu0 0
      %439 = vmatpush1.bf16.msra.mxu0 0
      %440 = vmatprep.subr.bf16.mxu0 0
      %441 = vmatpush1.bf16.msra.mxu0 0
      %442 = vmatprep.subr.bf16.mxu0 0
      %443 = vmatpush1.bf16.msra.mxu0 0
      %444 = vmatprep.subr.bf16.mxu0 0
      %445 = vmatpush1.bf16.msra.mxu0 0
      %446 = vmatprep.subr.bf16.mxu0 0
      %447 = vmatpush1.bf16.msra.mxu0 0
      %448 = vmatprep.mubr.bf16.mxu0 0
      %449 = vmatmul.mubr.bf16.gmra.mrb[0].mxu0 %v366
      %v450 = vpop.f32.mrb[0].mxu0
      %v451 = vadd.f32 %v360, %v450
      %v452 = vpop.f32.mrb[0].mxu0
      %v453 = vpop.f32.mrb[0].mxu0
      %v454 = vadd.f32 %v360, %v453
      %v455 = vpop.f32.mrb[0].mxu0
      %456 = vdwg.mxu0
      %v457 = vtanh.pop %v451
      %v458 = vtanh.pop %v454
      %v459 = vpack.c.bf16 %v458, %v457
      %v460 = vld [vmem:[%s3] sm:$0xf]
      %v461 = vld [vmem:[%s3 + $0x4] sm:$0xf]
      %v462 = vld [vmem:[%s3 + $0x8] sm:$0xf]
      %v463 = vld [vmem:[%s3 + $0xc] sm:$0xf]
      %v464 = vld [vmem:[%s3 + $0x10] sm:$0xf]
      %v465 = vld [vmem:[%s3 + $0x14] sm:$0xf]
      %v466 = vld [vmem:[%s3 + $0x18] sm:$0xf]
      %v467 = vld [vmem:[%s3 + $0x1c] sm:$0xf]
      %v468 = vld [vmem:[%s4] sm:$0x1]
      %v470 = vlaneseq
      %v471 = vshrl.u32 %v470, 7
      %v472 = vsub.s32 0, %v471
      %v473 = vrot.slane %v468, %v472
      %v483 = vunpack.c.l.b16 %v460
      %v484 = vunpack.c.l.b16 %v461
      %v485 = vunpack.c.l.b16 %v462
      %v486 = vunpack.c.l.b16 %v463
      %v487 = vunpack.c.l.b16 %v464
      %v488 = vunpack.c.l.b16 %v465
      %v489 = vunpack.c.l.b16 %v466
      %v490 = vunpack.c.l.b16 %v467
      %v491 = vpack.c.b16 %v484, %v483
      %v492 = vpack.c.b16 %v486, %v485
      %v493 = vpack.c.b16 %v488, %v487
      %v494 = vpack.c.b16 %v490, %v489
      %vm499 = vcmask 523264
      %v501 = vsel %vm499, %v459, 0
      %503 = vmatprep.subr.bf16.mxu0 0
      %504 = vmatpush1.bf16.msra.mxu0 %v491
      %505 = vmatprep.subr.bf16.mxu0 0
      %506 = vmatpush1.bf16.msra.mxu0 %v492
      %507 = vmatprep.subr.bf16.mxu0 0
      %508 = vmatpush1.bf16.msra.mxu0 %v493
      %509 = vmatprep.subr.bf16.mxu0 0
      %510 = vmatpush1.bf16.msra.mxu0 %v494
      %511 = vmatprep.subr.bf16.mxu0 0
      %512 = vmatpush1.bf16.msra.mxu0 0
      %513 = vmatprep.subr.bf16.mxu0 0
      %514 = vmatpush1.bf16.msra.mxu0 0
      %515 = vmatprep.subr.bf16.mxu0 0
      %516 = vmatpush1.bf16.msra.mxu0 0
      %517 = vmatprep.subr.bf16.mxu0 0
      %518 = vmatpush1.bf16.msra.mxu0 0
      %519 = vmatprep.subr.bf16.mxu0 0
      %520 = vmatpush1.bf16.msra.mxu0 0
      %521 = vmatprep.subr.bf16.mxu0 0
      %522 = vmatpush1.bf16.msra.mxu0 0
      %523 = vmatprep.subr.bf16.mxu0 0
      %524 = vmatpush1.bf16.msra.mxu0 0
      %525 = vmatprep.subr.bf16.mxu0 0
      %526 = vmatpush1.bf16.msra.mxu0 0
      %527 = vmatprep.subr.bf16.mxu0 0
      %528 = vmatpush1.bf16.msra.mxu0 0
      %529 = vmatprep.subr.bf16.mxu0 0
      %530 = vmatpush1.bf16.msra.mxu0 0
      %531 = vmatprep.subr.bf16.mxu0 0
      %532 = vmatpush1.bf16.msra.mxu0 0
      %533 = vmatprep.subr.bf16.mxu0 0
      %534 = vmatpush1.bf16.msra.mxu0 0
      %535 = vmatprep.mubr.bf16.mxu0 0
      %536 = vmatmul.mubr.bf16.gmra.mrb[0].mxu0 %v501
      %v537 = vpop.f32.mrb[0].mxu0
      %v538 = vadd.f32 %v473, %v537
      %v539 = vpop.f32.mrb[0].mxu0
      %v540 = vpop.f32.mrb[0].mxu0
      %v541 = vadd.f32 %v473, %v540
      %v542 = vpop.f32.mrb[0].mxu0
      %543 = vdwg.mxu0
      %v544 = vtanh.pop %v538
      %v545 = vtanh.pop %v541
      %v546 = vpack.c.bf16 %v545, %v544
      %v547 = vld [vmem:[%s5] sm:$0xf]
      %v548 = vld [vmem:[%s5 + $0x4] sm:$0xf]
      %v549 = vld [vmem:[%s5 + $0x8] sm:$0xf]
      %v550 = vld [vmem:[%s5 + $0xc] sm:$0xf]
      %v551 = vld [vmem:[%s6] sm:$0x1]
      %v553 = vlaneseq
      %v554 = vshrl.u32 %v553, 7
      %v555 = vsub.s32 0, %v554
      %v556 = vrot.slane %v551, %v555
      %v562 = vunpack.c.l.b16 %v547
      %v563 = vunpack.c.l.b16 %v548
      %v564 = vunpack.c.l.b16 %v549
      %v565 = vunpack.c.l.b16 %v550
      %v566 = vpack.c.b16 %v563, %v562
      %v567 = vpack.c.b16 %v565, %v564
      %vm570 = vcmask 261120
      %v572 = vsel %vm570, %v546, 0
      %574 = vmatprep.subr.bf16.mxu0 0
      %575 = vmatpush1.bf16.msra.mxu0 %v566
      %576 = vmatprep.subr.bf16.mxu0 0
      %577 = vmatpush1.bf16.msra.mxu0 %v567
      %578 = vmatprep.subr.bf16.mxu0 0
      %579 = vmatpush1.bf16.msra.mxu0 0
      %580 = vmatprep.subr.bf16.mxu0 0
      %581 = vmatpush1.bf16.msra.mxu0 0
      %582 = vmatprep.subr.bf16.mxu0 0
      %583 = vmatpush1.bf16.msra.mxu0 0
      %584 = vmatprep.subr.bf16.mxu0 0
      %585 = vmatpush1.bf16.msra.mxu0 0
      %586 = vmatprep.subr.bf16.mxu0 0
      %587 = vmatpush1.bf16.msra.mxu0 0
      %588 = vmatprep.subr.bf16.mxu0 0
      %589 = vmatpush1.bf16.msra.mxu0 0
      %590 = vmatprep.subr.bf16.mxu0 0
      %591 = vmatpush1.bf16.msra.mxu0 0
      %592 = vmatprep.subr.bf16.mxu0 0
      %593 = vmatpush1.bf16.msra.mxu0 0
      %594 = vmatprep.subr.bf16.mxu0 0
      %595 = vmatpush1.bf16.msra.mxu0 0
      %596 = vmatprep.subr.bf16.mxu0 0
      %597 = vmatpush1.bf16.msra.mxu0 0
      %598 = vmatprep.subr.bf16.mxu0 0
      %599 = vmatpush1.bf16.msra.mxu0 0
      %600 = vmatprep.subr.bf16.mxu0 0
      %601 = vmatpush1.bf16.msra.mxu0 0
      %602 = vmatprep.subr.bf16.mxu0 0
      %603 = vmatpush1.bf16.msra.mxu0 0
      %604 = vmatprep.subr.bf16.mxu0 0
      %605 = vmatpush1.bf16.msra.mxu0 0
      %606 = vmatprep.mubr.bf16.mxu0 0
      %607 = vmatmul.mubr.bf16.gmra.mrb[0].mxu0 %v572
      %v608 = vpop.f32.mrb[0].mxu0
      %v609 = vadd.f32 %v556, %v608
      %v610 = vpop.f32.mrb[0].mxu0
      %v611 = vpop.f32.mrb[0].mxu0
      %v612 = vadd.f32 %v556, %v611
      %v613 = vpop.f32.mrb[0].mxu0
      %614 = vdwg.mxu0
      %v615 = vtanh.pop %v609
      %v616 = vtanh.pop %v612
      %v617 = vpack.c.bf16 %v616, %v615
      %v618 = vld [vmem:[%s7] sm:$0xf]
      %v619 = vld [vmem:[%s7 + $0x4] sm:$0xf]
      %v620 = vld [vmem:[%s7 + $0x8] sm:$0xf]
      %v621 = vld [vmem:[%s7 + $0xc] sm:$0xf]
      %v622 = vld [vmem:[%s7 + $0x10] sm:$0xf]
      %v623 = vld [vmem:[%s7 + $0x14] sm:$0xf]
      %v624 = vld [vmem:[%s7 + $0x18] sm:$0xf]
      %v625 = vld [vmem:[%s7 + $0x1c] sm:$0xf]
      %v626 = vld [vmem:[%s8] sm:$0x1]
      %v628 = vlaneseq
      %v629 = vshrl.u32 %v628, 7
      %v630 = vsub.s32 0, %v629
      %v631 = vrot.slane %v626, %v630
      %v641 = vunpack.c.l.b16 %v618
      %v642 = vunpack.c.l.b16 %v619
      %v643 = vunpack.c.l.b16 %v620
      %v644 = vunpack.c.l.b16 %v621
      %v645 = vunpack.c.l.b16 %v622
      %v646 = vunpack.c.l.b16 %v623
      %v647 = vunpack.c.l.b16 %v624
      %v648 = vunpack.c.l.b16 %v625
      %v649 = vpack.c.b16 %v642, %v641
      %v650 = vpack.c.b16 %v644, %v643
      %v651 = vpack.c.b16 %v646, %v645
      %v652 = vpack.c.b16 %v648, %v647
      %v658 = vsel %vm499, %v617, 0
      %660 = vmatprep.subr.bf16.mxu0 0
      %661 = vmatpush1.bf16.msra.mxu0 %v649
      %662 = vmatprep.subr.bf16.mxu0 0
      %663 = vmatpush1.bf16.msra.mxu0 %v650
      %664 = vmatprep.subr.bf16.mxu0 0
      %665 = vmatpush1.bf16.msra.mxu0 %v651
      %666 = vmatprep.subr.bf16.mxu0 0
      %667 = vmatpush1.bf16.msra.mxu0 %v652
      %668 = vmatprep.subr.bf16.mxu0 0
      %669 = vmatpush1.bf16.msra.mxu0 0
      %670 = vmatprep.subr.bf16.mxu0 0
      %671 = vmatpush1.bf16.msra.mxu0 0
      %672 = vmatprep.subr.bf16.mxu0 0
      %673 = vmatpush1.bf16.msra.mxu0 0
      %674 = vmatprep.subr.bf16.mxu0 0
      %675 = vmatpush1.bf16.msra.mxu0 0
      %676 = vmatprep.subr.bf16.mxu0 0
      %677 = vmatpush1.bf16.msra.mxu0 0
      %678 = vmatprep.subr.bf16.mxu0 0
      %679 = vmatpush1.bf16.msra.mxu0 0
      %680 = vmatprep.subr.bf16.mxu0 0
      %681 = vmatpush1.bf16.msra.mxu0 0
      %682 = vmatprep.subr.bf16.mxu0 0
      %683 = vmatpush1.bf16.msra.mxu0 0
      %684 = vmatprep.subr.bf16.mxu0 0
      %685 = vmatpush1.bf16.msra.mxu0 0
      %686 = vmatprep.subr.bf16.mxu0 0
      %687 = vmatpush1.bf16.msra.mxu0 0
      %688 = vmatprep.subr.bf16.mxu0 0
      %689 = vmatpush1.bf16.msra.mxu0 0
      %690 = vmatprep.subr.bf16.mxu0 0
      %691 = vmatpush1.bf16.msra.mxu0 0
      %692 = vmatprep.mubr.bf16.mxu0 0
      %693 = vmatmul.mubr.bf16.gmra.mrb[0].mxu0 %v658
      %v694 = vpop.f32.mrb[0].mxu0
      %v695 = vadd.f32 %v631, %v694
      %v696 = vpop.f32.mrb[0].mxu0
      %v697 = vpop.f32.mrb[0].mxu0
      %v698 = vadd.f32 %v631, %v697
      %v699 = vpop.f32.mrb[0].mxu0
      %700 = vdwg.mxu0
      %v701 = vpack.c.bf16 %v698, %v695
      %v703 = vunpack.c.l.b16 %v701
      %v704 = vunpack.c.h.b16 %v701
      %v705 = vpack.c.b16 %v703, %v703
      %v706 = vpack.c.b16 %v704, %v704
      %709 = vst [vmem:[%s334] sm:$0xf] %v705
      %710 = vst [vmem:[%s334 + $0x4] sm:$0xf] %v706
      %s711 = smul.u32 2, %s20
      %p712 = scmp.lt.s32.totalorder %s711, 3
      %s713 = scalar_select %p712, %s711, 3
      %s714 = smul.addr %s713, 4
      %s715 = scalar_lea.vmem %s9, %s714
      // Predicated region
      $region57: #{fc_autoencoder_forward.1} parent=55 // pred_check
        %p716 = pneg %p232
      $region58: #{fc_autoencoder_forward.1} parent=55 // pred_check_branch
        %718 = sbr.rel (%p716) target = $region60
      $region59: #{fc_autoencoder_forward.1} parent=55 // pred_region
        %s719 = smul.u32 2, %s20
      $region60: #{fc_autoencoder_forward.1} parent=55 // pred_fallthru
        _
    $region56: #{fc_autoencoder_forward.1} parent=5 // pred_fallthru
      _
    %p720 = scmp.le.s32.totalorder 2, %s15
    // Predicated region
    $region61: #{fc_autoencoder_forward.1} parent=5 // pred_check
      %p721 = pneg %p720
    $region62: #{fc_autoencoder_forward.1} parent=5 // pred_check_branch
      %723 = sbr.rel (%p721) target = $region64
    $region63: #{fc_autoencoder_forward.1} parent=5 // pred_region
      %s724 = ssub.s32 %s15, 2
      // Predicated region
      $region65: #{fc_autoencoder_forward.1} parent=63 // pred_check
        %p725 = pneg %p238
      $region66: #{fc_autoencoder_forward.1} parent=63 // pred_check_branch
        %727 = sbr.rel (%p725) target = $region68
      $region67: #{fc_autoencoder_forward.1} parent=63 // pred_region
        %s728 = smul.u32 2, %s21
        %p729 = scmp.lt.s32.totalorder %s728, 3
        %s730 = scalar_select %p729, %s728, 3
        %s731 = smul.addr %s730, 4
        %s732 = scalar_lea.vmem %s9, %s731
      $region68: #{fc_autoencoder_forward.1} parent=63 // pred_fallthru
        _
    $region64: #{fc_autoencoder_forward.1} parent=5 // pred_fallthru
      _
  $region6: #{fc_autoencoder_forward.1} parent=0 // loop_footer
    %s19 = sadd.s32 1, %s15
  $region7: #{fc_autoencoder_forward.1} parent=0 // loop_footer_branch
    %14 = sbr.rel target = $region3
  $region8: #{fc_autoencoder_forward.1} parent=0 // loop_exit
    _

</llo_original>
